<compile_context>
chip_gen: v7x
topology: tpu7x:2x2x1
jax: 0.10.0
libtpu: 0.0.40
codegen_flags: <defaults>
</compile_context>

<pallas_src>
import functools

import jax
import jax.numpy as jnp
import numpy as np
from jax import lax
from jax.experimental import pallas as pl
from jax.experimental.pallas import tpu as pltpu

_SQRT_HALF = 0.7071067811865476
_MiB = 1024 * 1024


def _gelu_exact(x):
    # PyTorch nn.GELU() default (approximate='none'): erf-based GELU.
    return 0.5 * x * (1.0 + lax.erf(x * _SQRT_HALF))


def _round_up(n, m):
    return ((n + m - 1) // m) * m


def _cdiv(a, b):
    return -(-a // b)


def _tpu_generation():
    """Best-effort generation detection (used only for VMEM budgets / grid shaping)."""
    try:
        kind = jax.devices()[0].device_kind.lower()
    except Exception:
        kind = ""
    if "v5" in kind or "v6" in kind:
        return "v5v6"          # 128 MiB VMEM, 1 TensorCore per chip
    if "v7" in kind:
        return "v7"            # 64 MiB VMEM per TC, 2 TensorCores per chip
    return "unknown"           # conservative (v7x-shaped limits)


# -----------------------------------------------------------------------------
# Kernel
# -----------------------------------------------------------------------------
def _fan_layer_kernel(gates_ref,          # SMEM (2,)  [sigmoid(gate), 1-sigmoid(gate)]
                      mf_ref, x_ref,      # VMEM (TM, s_in) bf16 each
                      wpg_ref, bpg_ref,   # (s_in, q_pad+r_pad) bf16, (1, q_pad+r_pad) f32
                      w1_ref, b1_ref,     # (K_fused, Hp) bf16, (1, Hp) f32
                      w2_ref, b2_ref,     # (Hp, Pp) bf16, (1, Pp) f32
                      out_ref,            # (TM, Pp)
                      lhs_ref,            # VMEM scratch (TM, K_fused) bf16: fused fc1 LHS
                      *, q_pad, r_pad):
    mf = mf_ref[...]                      # bf16 straight into the MXU

    # Fused input_linear_p + input_linear_g: one MXU weight load, one bias add,
    # f32 accumulation. p / g come out as 128-aligned lane-dense slices.
    pg = jnp.dot(mf, wpg_ref[...], preferred_element_type=jnp.float32) + bpg_ref[...]
    p = pg[:, :q_pad]
    g = _gelu_exact(pg[:, q_pad:])

    gate = gates_ref[0]
    one_minus_gate = gates_ref[1]

    # Pack the fc1 LHS [gate*cos(p) | gate*sin(p) | (1-gate)*g | x] into one
    # bf16 scratch so fc1 is a single matmul (one MXU accumulation chain, one
    # epilogue) instead of four split dots with individually padded K.
    # Padded lanes (e.g. cos(0)=1) multiply zero fc1 rows -> contribute zero.
    lhs_ref[:, 0:q_pad] = (gate * jnp.cos(p)).astype(jnp.bfloat16)
    lhs_ref[:, q_pad:2 * q_pad] = (gate * jnp.sin(p)).astype(jnp.bfloat16)
    lhs_ref[:, 2 * q_pad:2 * q_pad + r_pad] = (one_minus_gate * g).astype(jnp.bfloat16)
    lhs_ref[:, 2 * q_pad + r_pad:] = x_ref[...]

    h = jnp.dot(lhs_ref[...], w1_ref[...], preferred_element_type=jnp.float32) + b1_ref[...]
    h = jnp.maximum(h, 0.0).astype(jnp.bfloat16)      # ReLU, bf16 back into the MXU

    out = jnp.dot(h, w2_ref[...], preferred_element_type=jnp.float32) + b2_ref[...]
    out_ref[...] = out.astype(out_ref.dtype)


# -----------------------------------------------------------------------------
# One-time weight packing (call once per weight set, reuse across forwards)
# -----------------------------------------------------------------------------
def prepare_fan_params(params, seq_len, pred_len, *, lane=128):
    f32, bf16 = jnp.float32, jnp.bfloat16
    q = pred_len // 4
    r = pred_len - pred_len // 2
    # Same implicit constraint as the PyTorch module (concat feeding
    # Linear(seq_len + pred_len, ...)): the fan pieces must sum to pred_len.
    assert 2 * q + r == pred_len, "FANLayer requires pred_len % 4 in {0, 1}"
    hidden = 3 * (seq_len + pred_len)

    q_pad = _round_up(q, lane)             # lane-dense cos/sin slices
    r_pad = _round_up(r, lane)             # lane-dense gelu slice
    hid_pad = _round_up(hidden, lane)      # lane-dense ReLU + fc2 contraction
    pred_pad = _round_up(pred_len, lane)   # lane-dense output stores
    # Pad the streamed-input lane width only when seq_len is large enough that
    # masked vld / unaligned K costs more than the extra zero DMA.
    s_in = _round_up(seq_len, lane) if seq_len >= 64 else seq_len
    k_fused = 2 * q_pad + r_pad + s_in     # fc1 contraction after fusion

    # Fused input_linear_p|g weight (padded rows/cols are zero).
    wpg = jnp.zeros((s_in, q_pad + r_pad), f32)
    wpg = wpg.at[:seq_len, :q].set(params["wp"].T.astype(f32))
    wpg = wpg.at[:seq_len, q_pad:q_pad + r].set(params["wg"].T.astype(f32))
    bpg = jnp.zeros((1, q_pad + r_pad), f32)
    bpg = bpg.at[0, :q].set(params["bp"].astype(f32))
    bpg = bpg.at[0, q_pad:q_pad + r].set(params["bg"].astype(f32))

    # Row-fused fc1 weight laid out to match the packed LHS; padded rows/cols
    # are zero so padded lanes contribute exactly zero.
    w1_t = params["w1"].T.astype(f32)                  # (seq_len+pred_len, 3H)
    w1f = jnp.zeros((k_fused, hid_pad), f32)
    w1f = w1f.at[0:q, :hidden].set(w1_t[0:q])                          # cos rows
    w1f = w1f.at[q_pad:q_pad + q, :hidden].set(w1_t[q:2 * q])          # sin rows
    w1f = w1f.at[2 * q_pad:2 * q_pad + r, :hidden].set(w1_t[2 * q:pred_len])   # g rows
    w1f = w1f.at[2 * q_pad + r_pad:2 * q_pad + r_pad + seq_len,
                 :hidden].set(w1_t[pred_len:])                          # x rows
    b1 = jnp.zeros((1, hid_pad), f32).at[0, :hidden].set(params["b1"].astype(f32))

    w2 = jnp.zeros((hid_pad, pred_pad), f32)
    w2 = w2.at[:hidden, :pred_len].set(params["w2"].T.astype(f32))
    b2 = jnp.zeros((1, pred_pad), f32).at[0, :pred_len].set(params["b2"].astype(f32))

    # sigmoid(gate) hoisted out of the kernel; pass (gate, 1-gate) via SMEM.
    gate_s = jax.nn.sigmoid(params["gate"].astype(f32)[0])
    gates = jnp.stack([gate_s, 1.0 - gate_s])

    return dict(
        gates=gates,
        wpg=wpg.astype(bf16), bpg=bpg,
        w1=w1f.astype(bf16), b1=b1,
        w2=w2.astype(bf16), b2=b2,
        meta=dict(seq_len=seq_len, pred_len=pred_len, q_pad=q_pad, r_pad=r_pad,
                  s_in=s_in, k_fused=k_fused, hid_pad=hid_pad, pred_pad=pred_pad),
    )


# -----------------------------------------------------------------------------
# Forward
# -----------------------------------------------------------------------------
def fan_layer_forward(main_freq, x, params=None, *, prepared=None, tm=None,
                      out_dtype=jnp.float32):
    batch, enc_in, seq_len = main_freq.shape
    if prepared is None:
        # For repeated calls, build `prepared` once via prepare_fan_params()
        # and pass it in — weight packing is not free.
        pred_len = params["b2"].shape[0]
        prepared = prepare_fan_params(params, seq_len, pred_len)
    meta = prepared["meta"]
    assert meta["seq_len"] == seq_len
    pred_len = meta["pred_len"]
    q_pad, r_pad = meta["q_pad"], meta["r_pad"]
    s_in, k_fused = meta["s_in"], meta["k_fused"]
    hid_pad, pred_pad = meta["hid_pad"], meta["pred_pad"]

    gen = _tpu_generation()
    out_bytes = jnp.dtype(out_dtype).itemsize

    M = batch * enc_in
    m_pad16 = _round_up(M, 16)             # bf16 sublane packing: 16-row granules

    # --- row-tile selection ---------------------------------------------------
    tm = 256 if tm is None else tm         # MXU-native M on v6e/v7x
    tm = max(16, min(_round_up(tm, 16), m_pad16))
    # v7x: the 1-D grid is sharded across 2 TensorCores; prefer >= 4 grid steps
    # when M allows so each core gets >= 2 iterations of DMA/compute overlap.
    if gen == "v7" and m_pad16 >= 4 * 128 and _cdiv(m_pad16, tm) < 4:
        tm = 128

    def _footprint(tm_):
        inbuf = 2 * 2 * tm_ * s_in * 2                      # mf + x, double-buffered bf16
        outbuf = 2 * tm_ * pred_pad * out_bytes             # output, double-buffered
        weights = 2 * (s_in * (q_pad + r_pad)               # fused p|g weight  (bf16)
                       + k_fused * hid_pad                  # fused fc1         (bf16)
                       + hid_pad * pred_pad)                # fc2               (bf16)
        biases = 4 * (q_pad + r_pad + hid_pad + pred_pad)
        scratch = tm_ * k_fused * 2                         # packed fc1 LHS   (bf16)
        interm = tm_ * ((q_pad + r_pad) * 4                 # pg               (f32)
                        + (2 * q_pad + r_pad) * 2           # cos/sin/g temps  (bf16)
                        + hid_pad * 6                       # h f32 + bf16 copy
                        + pred_pad * 4)                     # fc2 f32 result
        return inbuf + outbuf + weights + biases + scratch + interm

    # Generation-aware VMEM budget: v5e/v6e have 128 MiB per TC, v7x only 64 MiB.
    if gen == "v5v6":
        budget, limit_cap = 88 * _MiB, 112 * _MiB
    else:
        budget, limit_cap = 36 * _MiB, 56 * _MiB

    tm_floor = max(16, min(128, m_pad16))   # don't starve the MXU below 128 rows
    while tm > tm_floor and _footprint(tm) > budget:
        tm = max(tm_floor, _round_up(tm // 2, 16))
    # TODO(synk): for very large hidden sizes where even tm=128 overflows the
    # budget, tile hid_pad/pred_pad with a 2-D grid + fc2 accumulator instead of
    # shrinking tm further.
    vmem_limit = int(max(32 * _MiB, min(limit_cap, int(_footprint(tm) * 1.25))))

    steps = _cdiv(m_pad16, tm)
    if gen == "v7" and steps > 1 and steps % 2 == 1:
        steps += 1                          # even step count keeps both TCs busy
    m_pad = steps * tm

    # --- per-call input prep (cheap; weights were packed once in `prepared`) ---
    bf16 = jnp.bfloat16
    mf2 = main_freq.reshape(M, seq_len).astype(bf16)
    x2 = x.reshape(M, seq_len).astype(bf16)
    if m_pad != M or s_in != seq_len:
        mf2 = jnp.pad(mf2, ((0, m_pad - M), (0, s_in - seq_len)))
        x2 = jnp.pad(x2, ((0, m_pad - M), (0, s_in - seq_len)))

    # Grid-invariant weights/biases: single-buffered residents.
    resident = lambda a: pl.BlockSpec(a.shape, lambda i: (0,) * a.ndim,
                                      pipeline_mode=pl.Buffered(1))

    kernel = functools.partial(_fan_layer_kernel, q_pad=q_pad, r_pad=r_pad)

    out = pl.pallas_call(
        kernel,
        out_shape=jax.ShapeDtypeStruct((m_pad, pred_pad), out_dtype),
        grid_spec=pltpu.PrefetchScalarGridSpec(
            num_scalar_prefetch=0,
            grid=(steps,),
            in_specs=[
                pl.BlockSpec(memory_space=pltpu.MemorySpace.SMEM),   # gates (2,)
                pl.BlockSpec((tm, s_in), lambda i: (i, 0)),          # main_freq rows
                pl.BlockSpec((tm, s_in), lambda i: (i, 0)),          # x rows
                resident(prepared["wpg"]), resident(prepared["bpg"]),
                resident(prepared["w1"]), resident(prepared["b1"]),
                resident(prepared["w2"]), resident(prepared["b2"]),
            ],
            out_specs=pl.BlockSpec((tm, pred_pad), lambda i: (i, 0)),
            scratch_shapes=[pltpu.VMEM((tm, k_fused), jnp.bfloat16)],
        ),
        compiler_params=pltpu.CompilerParams(
            dimension_semantics=("parallel",),
            vmem_limit_bytes=vmem_limit),
    )(prepared["gates"], mf2, x2, prepared["wpg"], prepared["bpg"],
      prepared["w1"], prepared["b1"], prepared["w2"], prepared["b2"])

    if m_pad == M and pred_pad == pred_len:
        return out.reshape(batch, enc_in, pred_len)
    return out[:M, :pred_len].reshape(batch, enc_in, pred_len)


# -----------------------------------------------------------------------------
# Pure-JAX f32 reference matching the PyTorch forward (with concatenations)
# -----------------------------------------------------------------------------
def fan_layer_ref(main_freq, x, params):
    gate = jax.nn.sigmoid(params["gate"][0])
    p = jnp.einsum("bcs,os->bco", main_freq, params["wp"]) + params["bp"]
    gpre = jnp.einsum("bcs,os->bco", main_freq, params["wg"]) + params["bg"]
    g = _gelu_exact(gpre)
    fan = jnp.concatenate(
        [gate * jnp.cos(p), gate * jnp.sin(p), (1.0 - gate) * g], axis=-1)
    mlp_in = jnp.concatenate([fan, x], axis=-1)
    h = jnp.maximum(
        jnp.einsum("bci,oi->bco", mlp_in, params["w1"]) + params["b1"], 0.0)
    return jnp.einsum("bch,oh->bco", h, params["w2"]) + params["b2"]


def init_params(key, seq_len, pred_len):
    """Deterministic init mimicking nn.Linear / nn.Parameter(randn(1)) shapes."""
    q = pred_len // 4
    r = pred_len - pred_len // 2
    H = seq_len + pred_len
    ks = jax.random.split(key, 9)

    def linear(kw, kb, out_dim, in_dim):
        bound = 1.0 / np.sqrt(in_dim)
        w = jax.random.uniform(kw, (out_dim, in_dim), jnp.float32, -bound, bound)
        b = jax.random.uniform(kb, (out_dim,), jnp.float32, -bound, bound)
        return w, b

    wp, bp = linear(ks[0], ks[1], q, seq_len)           # input_linear_p
    wg, bg = linear(ks[2], ks[3], r, seq_len)           # input_linear_g
    w1, b1 = linear(ks[4], ks[5], 3 * H, H)             # mlp.fc1
    w2, b2 = linear(ks[6], ks[7], pred_len, 3 * H)      # mlp.fc2
    gate = jax.random.normal(ks[8], (1,), jnp.float32)  # nn.Parameter(randn(1))
    return dict(wp=wp, bp=bp, wg=wg, bg=bg, w1=w1, b1=b1, w2=w2, b2=b2, gate=gate)


if __name__ == "__main__":
    batch, enc_in, seq_len, pred_len = 2, 4, 16, 16

    key = jax.random.PRNGKey(0)
    k_mf, k_x, k_p = jax.random.split(key, 3)
    main_freq = jax.random.normal(k_mf, (batch, enc_in, seq_len), jnp.float32)
    x = jax.random.normal(k_x, (batch, enc_in, seq_len), jnp.float32)
    params = init_params(k_p, seq_len, pred_len)

    prepared = prepare_fan_params(params, seq_len, pred_len)  # one-time weight packing
    out = jax.block_until_ready(fan_layer_forward(main_freq, x, prepared=prepared))

    ref = jax.block_until_ready(fan_layer_ref(main_freq, x, params))
    # bf16 MXU operands (f32 accumulation) -> looser tolerance than pure f32.
    np.testing.assert_allclose(np.asarray(out), np.asarray(ref),
                               rtol=5e-2, atol=5e-2)
    assert out.shape == (batch, enc_in, pred_len)
    print("KERNEL_OK")
</pallas_src>

<mosaic_0001>
module attributes {stable_mosaic.version = 11 : i64} {
  func.func @_fan_layer_kernel(%arg0: i32, %arg1: memref<2xf32, #tpu.memory_space<smem>>, %arg2: memref<16x16xbf16, #tpu.memory_space<vmem>>, %arg3: memref<16x16xbf16, #tpu.memory_space<vmem>>, %arg4: memref<16x256xbf16, #tpu.memory_space<vmem>>, %arg5: memref<1x256xf32, #tpu.memory_space<vmem>>, %arg6: memref<400x128xbf16, #tpu.memory_space<vmem>>, %arg7: memref<1x128xf32, #tpu.memory_space<vmem>>, %arg8: memref<128x128xbf16, #tpu.memory_space<vmem>>, %arg9: memref<1x128xf32, #tpu.memory_space<vmem>>, %arg10: memref<16x128xf32, #tpu.memory_space<vmem>>, %arg11: memref<16x400xbf16, #tpu.memory_space<vmem>>) attributes {dimension_semantics = [#tpu.dimension_semantics<parallel>], iteration_bounds = array<i64: 1>, scalar_prefetch = 0 : i64, scratch_operands = 1 : i64, tpu.core_type = #tpu.core_type<tc>, window_params = [{transform_indices = @transform_0, window_bounds = array<i64: 2>}, {transform_indices = @transform_1, window_bounds = array<i64: 16, 16>}, {transform_indices = @transform_2, window_bounds = array<i64: 16, 16>}, {pipeline_mode = #tpu.pipeline_mode<synchronous>, transform_indices = @transform_3, window_bounds = array<i64: 16, 256>}, {pipeline_mode = #tpu.pipeline_mode<synchronous>, transform_indices = @transform_4, window_bounds = array<i64: 1, 256>}, {pipeline_mode = #tpu.pipeline_mode<synchronous>, transform_indices = @transform_5, window_bounds = array<i64: 400, 128>}, {pipeline_mode = #tpu.pipeline_mode<synchronous>, transform_indices = @transform_6, window_bounds = array<i64: 1, 128>}, {pipeline_mode = #tpu.pipeline_mode<synchronous>, transform_indices = @transform_7, window_bounds = array<i64: 128, 128>}, {pipeline_mode = #tpu.pipeline_mode<synchronous>, transform_indices = @transform_8, window_bounds = array<i64: 1, 128>}, {transform_indices = @transform_9, window_bounds = array<i64: 16, 128>}]} {
    %c0 = arith.constant 0 : index
    %c0_0 = arith.constant 0 : index
    %0 = vector.load %arg2[%c0, %c0_0] : memref<16x16xbf16, #tpu.memory_space<vmem>>, vector<16x16xbf16>
    %c0_1 = arith.constant 0 : index
    %c0_2 = arith.constant 0 : index
    %1 = vector.load %arg4[%c0_1, %c0_2] : memref<16x256xbf16, #tpu.memory_space<vmem>>, vector<16x256xbf16>
    %cst = arith.constant dense<0.000000e+00> : vector<16x256xf32>
    %2 = tpu.matmul %0, %1, %cst {dimension_numbers = #tpu.dot_dimension_numbers<[1], [0], [0], [1], [0, 0, 1, 1], [], []>} : vector<16x16xbf16>, vector<16x256xbf16>, vector<16x256xf32> -> vector<16x256xf32>
    %c0_3 = arith.constant 0 : index
    %c0_4 = arith.constant 0 : index
    %3 = vector.load %arg5[%c0_3, %c0_4] : memref<1x256xf32, #tpu.memory_space<vmem>>, vector<1x256xf32>
    %4 = vector.broadcast %3 : vector<1x256xf32> to vector<16x256xf32>
    %5 = arith.addf %2, %4 : vector<16x256xf32>
    %6 = vector.extract_strided_slice %5 {offsets = [0, 0], sizes = [16, 128], strides = [1, 1]} : vector<16x256xf32> to vector<16x128xf32>
    %7 = vector.extract_strided_slice %5 {offsets = [0, 128], sizes = [16, 128], strides = [1, 1]} : vector<16x256xf32> to vector<16x128xf32>
    %cst_5 = arith.constant 5.000000e-01 : f32
    %8 = vector.broadcast %cst_5 : f32 to vector<16x128xf32>
    %9 = arith.mulf %8, %7 : vector<16x128xf32>
    %cst_6 = arith.constant 0.707106769 : f32
    %10 = vector.broadcast %cst_6 : f32 to vector<16x128xf32>
    %11 = arith.mulf %7, %10 : vector<16x128xf32>
    %12 = math.erf %11 : vector<16x128xf32>
    %cst_7 = arith.constant 1.000000e+00 : f32
    %13 = vector.broadcast %cst_7 : f32 to vector<16x128xf32>
    %14 = arith.addf %13, %12 : vector<16x128xf32>
    %15 = arith.mulf %9, %14 : vector<16x128xf32>
    %c0_8 = arith.constant 0 : index
    %16 = memref.load %arg1[%c0_8] : memref<2xf32, #tpu.memory_space<smem>>
    %c1 = arith.constant 1 : index
    %17 = memref.load %arg1[%c1] : memref<2xf32, #tpu.memory_space<smem>>
    %18 = math.cos %6 : vector<16x128xf32>
    %19 = vector.broadcast %16 : f32 to vector<16x128xf32>
    %20 = arith.mulf %19, %18 : vector<16x128xf32>
    %21 = arith.truncf %20 : vector<16x128xf32> to vector<16x128xbf16>
    %c0_9 = arith.constant 0 : index
    %c0_10 = arith.constant 0 : index
    %22 = vector.load %arg11[%c0_9, %c0_10] : memref<16x400xbf16, #tpu.memory_space<vmem>>, vector<16x128xbf16>
    tpu.vector_store %arg11[%c0_9, %c0_10], %21 {strides = array<i32>} : memref<16x400xbf16, #tpu.memory_space<vmem>>, vector<16x128xbf16>,
    %23 = math.sin %6 : vector<16x128xf32>
    %24 = vector.broadcast %16 : f32 to vector<16x128xf32>
    %25 = arith.mulf %24, %23 : vector<16x128xf32>
    %26 = arith.truncf %25 : vector<16x128xf32> to vector<16x128xbf16>
    %c0_11 = arith.constant 0 : index
    %c128 = arith.constant 128 : index
    %27 = vector.load %arg11[%c0_11, %c128] : memref<16x400xbf16, #tpu.memory_space<vmem>>, vector<16x128xbf16>
    tpu.vector_store %arg11[%c0_11, %c128], %26 {strides = array<i32>} : memref<16x400xbf16, #tpu.memory_space<vmem>>, vector<16x128xbf16>,
    %28 = vector.broadcast %17 : f32 to vector<16x128xf32>
    %29 = arith.mulf %28, %15 : vector<16x128xf32>
    %30 = arith.truncf %29 : vector<16x128xf32> to vector<16x128xbf16>
    %c0_12 = arith.constant 0 : index
    %c256 = arith.constant 256 : index
    %31 = vector.load %arg11[%c0_12, %c256] : memref<16x400xbf16, #tpu.memory_space<vmem>>, vector<16x128xbf16>
    tpu.vector_store %arg11[%c0_12, %c256], %30 {strides = array<i32>} : memref<16x400xbf16, #tpu.memory_space<vmem>>, vector<16x128xbf16>,
    %c0_13 = arith.constant 0 : index
    %c0_14 = arith.constant 0 : index
    %32 = vector.load %arg3[%c0_13, %c0_14] : memref<16x16xbf16, #tpu.memory_space<vmem>>, vector<16x16xbf16>
    %c0_15 = arith.constant 0 : index
    %c384 = arith.constant 384 : index
    %33 = vector.load %arg11[%c0_15, %c384] : memref<16x400xbf16, #tpu.memory_space<vmem>>, vector<16x16xbf16>
    tpu.vector_store %arg11[%c0_15, %c384], %32 {strides = array<i32>} : memref<16x400xbf16, #tpu.memory_space<vmem>>, vector<16x16xbf16>,
    %c0_16 = arith.constant 0 : index
    %c0_17 = arith.constant 0 : index
    %34 = vector.load %arg11[%c0_16, %c0_17] : memref<16x400xbf16, #tpu.memory_space<vmem>>, vector<16x400xbf16>
    %c0_18 = arith.constant 0 : index
    %c0_19 = arith.constant 0 : index
    %35 = vector.load %arg6[%c0_18, %c0_19] : memref<400x128xbf16, #tpu.memory_space<vmem>>, vector<400x128xbf16>
    %cst_20 = arith.constant dense<0.000000e+00> : vector<16x128xf32>
    %36 = tpu.matmul %34, %35, %cst_20 {dimension_numbers = #tpu.dot_dimension_numbers<[1], [0], [0], [1], [0, 0, 1, 1], [], []>} : vector<16x400xbf16>, vector<400x128xbf16>, vector<16x128xf32> -> vector<16x128xf32>
    %c0_21 = arith.constant 0 : index
    %c0_22 = arith.constant 0 : index
    %37 = vector.load %arg7[%c0_21, %c0_22] : memref<1x128xf32, #tpu.memory_space<vmem>>, vector<1x128xf32>
    %38 = vector.broadcast %37 : vector<1x128xf32> to vector<16x128xf32>
    %39 = arith.addf %36, %38 : vector<16x128xf32>
    %cst_23 = arith.constant 0.000000e+00 : f32
    %40 = vector.broadcast %cst_23 : f32 to vector<16x128xf32>
    %41 = arith.maximumf %39, %40 : vector<16x128xf32>
    %42 = arith.truncf %41 : vector<16x128xf32> to vector<16x128xbf16>
    %c0_24 = arith.constant 0 : index
    %c0_25 = arith.constant 0 : index
    %43 = vector.load %arg8[%c0_24, %c0_25] : memref<128x128xbf16, #tpu.memory_space<vmem>>, vector<128x128xbf16>
    %cst_26 = arith.constant dense<0.000000e+00> : vector<16x128xf32>
    %44 = tpu.matmul %42, %43, %cst_26 {dimension_numbers = #tpu.dot_dimension_numbers<[1], [0], [0], [1], [0, 0, 1, 1], [], []>} : vector<16x128xbf16>, vector<128x128xbf16>, vector<16x128xf32> -> vector<16x128xf32>
    %c0_27 = arith.constant 0 : index
    %c0_28 = arith.constant 0 : index
    %45 = vector.load %arg9[%c0_27, %c0_28] : memref<1x128xf32, #tpu.memory_space<vmem>>, vector<1x128xf32>
    %46 = vector.broadcast %45 : vector<1x128xf32> to vector<16x128xf32>
    %47 = arith.addf %44, %46 : vector<16x128xf32>
    %c0_29 = arith.constant 0 : index
    %c0_30 = arith.constant 0 : index
    %48 = vector.load %arg10[%c0_29, %c0_30] : memref<16x128xf32, #tpu.memory_space<vmem>>, vector<16x128xf32>
    tpu.vector_store %arg10[%c0_29, %c0_30], %47 {strides = array<i32>} : memref<16x128xf32, #tpu.memory_space<vmem>>, vector<16x128xf32>,
    return
  }
  func.func @transform_0(%arg0: i32) -> i32 {
    %c0_i32 = arith.constant 0 : i32
    %c0_i32_0 = arith.constant 0 : i32
    return %c0_i32 : i32
  }
  func.func @transform_1(%arg0: i32) -> (i32, i32) {
    %c0_i32 = arith.constant 0 : i32
    %c0_i32_0 = arith.constant 0 : i32
    return %arg0, %c0_i32 : i32, i32
  }
  func.func @transform_2(%arg0: i32) -> (i32, i32) {
    %c0_i32 = arith.constant 0 : i32
    %c0_i32_0 = arith.constant 0 : i32
    return %arg0, %c0_i32 : i32, i32
  }
  func.func @transform_3(%arg0: i32) -> (i32, i32) {
    %c0_i32 = arith.constant 0 : i32
    %c0_i32_0 = arith.constant 0 : i32
    %c0_i32_1 = arith.constant 0 : i32
    return %c0_i32, %c0_i32_0 : i32, i32
  }
  func.func @transform_4(%arg0: i32) -> (i32, i32) {
    %c0_i32 = arith.constant 0 : i32
    %c0_i32_0 = arith.constant 0 : i32
    %c0_i32_1 = arith.constant 0 : i32
    return %c0_i32, %c0_i32_0 : i32, i32
  }
  func.func @transform_5(%arg0: i32) -> (i32, i32) {
    %c0_i32 = arith.constant 0 : i32
    %c0_i32_0 = arith.constant 0 : i32
    %c0_i32_1 = arith.constant 0 : i32
    return %c0_i32, %c0_i32_0 : i32, i32
  }
  func.func @transform_6(%arg0: i32) -> (i32, i32) {
    %c0_i32 = arith.constant 0 : i32
    %c0_i32_0 = arith.constant 0 : i32
    %c0_i32_1 = arith.constant 0 : i32
    return %c0_i32, %c0_i32_0 : i32, i32
  }
  func.func @transform_7(%arg0: i32) -> (i32, i32) {
    %c0_i32 = arith.constant 0 : i32
    %c0_i32_0 = arith.constant 0 : i32
    %c0_i32_1 = arith.constant 0 : i32
    return %c0_i32, %c0_i32_0 : i32, i32
  }
  func.func @transform_8(%arg0: i32) -> (i32, i32) {
    %c0_i32 = arith.constant 0 : i32
    %c0_i32_0 = arith.constant 0 : i32
    %c0_i32_1 = arith.constant 0 : i32
    return %c0_i32, %c0_i32_0 : i32, i32
  }
  func.func @transform_9(%arg0: i32) -> (i32, i32) {
    %c0_i32 = arith.constant 0 : i32
    %c0_i32_0 = arith.constant 0 : i32
    return %arg0, %c0_i32 : i32, i32
  }
}

</mosaic_0001>

<llo_original>
// kernel: tpu_custom_call.1
$region0: #{tpu_custom_call.1}
  #allocation0 [shape = 'u32[]', space=smem, size = 0x4, offset = 0x4, fixed_abs, tag = 'smem constant byte address 0x4 - core index']
  #allocation1 [shape = 'u32[144,128]{1,0:T(1,128)}', space=vmem, size = 0x12000, scoped, tag = 'internal scratch']
  #allocation2 [shape = 'bf16[16,400]{1,0:T(16,128)(2,1)}', space=vmem, size = 0x4000, scoped, tag = 'scratch operand']
  %s0 = inlined_call_operand.hbm [shape: f32[2], index: 0, kind: input, shape index: {}]
  %s1 = inlined_call_operand.hbm [shape: bf16[16,16], index: 1, kind: input, shape index: {}]
  %s2 = inlined_call_operand.hbm [shape: bf16[16,16], index: 2, kind: input, shape index: {}]
  %s3 = inlined_call_operand.hbm [shape: bf16[16,256], index: 3, kind: input, shape index: {}]
  %s4 = inlined_call_operand.vmem [shape: f32[1,256], index: 4, kind: input, shape index: {}]
  %s5 = inlined_call_operand.hbm [shape: bf16[400,128], index: 5, kind: input, shape index: {}]
  %s6 = inlined_call_operand.vmem [shape: f32[1,128], index: 6, kind: input, shape index: {}]
  %s7 = inlined_call_operand.hbm [shape: bf16[128,128], index: 7, kind: input, shape index: {}]
  %s8 = inlined_call_operand.vmem [shape: f32[1,128], index: 8, kind: input, shape index: {}]
  %s9 = inlined_call_operand.hbm [shape: f32[16,128], index: 9, kind: output, shape index: {}]
  %s10 = sld [smem:[#allocation0]]
  $region70: #{tpu_custom_call.1} parent=0
    _
  %s12 = ssub.s32 1, %s10
  %s13 = scalar_select 0, %s12, %s10
  $region1: #{tpu_custom_call.1} parent=0
    #allocation3 [shape = 'u8[512]{0}', space=smem, size = 0x200, scoped, tag = 'input window, operand 0, single buffered']
    #allocation4 [shape = 's32[1]{0}', space=sflag, size = 0x4, scoped, tag = 'scoped memory for tpu_custom_call.1']
    #allocation5 [shape = 's32[1]{0}', space=sflag, size = 0x4, scoped, tag = 'scoped memory for tpu_custom_call.1']
    #allocation6 [shape = 's32[1]{0}', space=sflag, size = 0x4, scoped, tag = 'scoped memory for tpu_custom_call.1']
    #allocation7 [shape = 'u8[4096]{0}', space=vmem, size = 0x1000, scoped, tag = 'input window, operand 1, single buffered']
    #allocation8 [shape = 'u8[4096]{0}', space=vmem, size = 0x1000, scoped, tag = 'input window, operand 2, single buffered']
    #allocation9 [shape = 's32[1]{0}', space=sflag, size = 0x4, scoped, tag = 'scoped memory for tpu_custom_call.1']
    #allocation10 [shape = 'u8[8192]{0}', space=vmem, size = 0x2000, scoped, tag = 'input window, operand 3, single buffered']
    #allocation11 [shape = 'u8[102400]{0}', space=vmem, size = 0x19000, scoped, tag = 'input window, operand 5, single buffered']
    #allocation12 [shape = 's32[1]{0}', space=sflag, size = 0x4, scoped, tag = 'scoped memory for tpu_custom_call.1']
    #allocation13 [shape = 'u8[32768]{0}', space=vmem, size = 0x8000, scoped, tag = 'input window, operand 7, single buffered']
    #allocation14 [shape = 'u8[8192]{0}', space=vmem, size = 0x2000, scoped, tag = 'output window, operand 0, single buffered']
    %14 = vsyncpa [#allocation6], 0
    %15 = vsyncpa [#allocation4], 0
    %16 = vsyncpa [#allocation9], 0
    %17 = vsyncpa [#allocation12], 0
    %18 = vsyncpa [#allocation5], 0
    // Predicated region
    $region2: #{tpu_custom_call.1} parent=1 // pred_check
      _
    $region3: #{tpu_custom_call.1} parent=1 // pred_check_branch
      %20 = sbr.rel (0) target = $region5
    $region4: #{tpu_custom_call.1} parent=1 // pred_region
      %s22 = ssub.s32 16, 16
      %23 = vsyncadd [#allocation6], %s22
      %26 = dma.hbm_to_smem %s0, 16, [#allocation3], [#allocation6]
    $region5: #{tpu_custom_call.1} parent=1 // pred_fallthru
      _
    // Predicated region
    $region6: #{tpu_custom_call.1} parent=1 // pred_check
      _
    $region7: #{tpu_custom_call.1} parent=1 // pred_check_branch
      %28 = sbr.rel (0) target = $region9
    $region8: #{tpu_custom_call.1} parent=1 // pred_region
      %s30 = ssub.s32 128, 128
      %31 = vsyncadd [#allocation4], %s30
      %s32 = sshll.u32 [#allocation7], 4
      %s33 = int_to_ptr.vmem [resolvable:$true] %s32
      %38 = dma.hbm_to_vmem [thread:$0]  %s1, 128, %s33, [#allocation4], 64, 64, 4
    $region9: #{tpu_custom_call.1} parent=1 // pred_fallthru
      _
    // Predicated region
    $region10: #{tpu_custom_call.1} parent=1 // pred_check
      _
    $region11: #{tpu_custom_call.1} parent=1 // pred_check_branch
      %40 = sbr.rel (0) target = $region13
    $region12: #{tpu_custom_call.1} parent=1 // pred_region
      %s42 = ssub.s32 128, 128
      %43 = vsyncadd [#allocation9], %s42
      %s44 = sshll.u32 [#allocation8], 4
      %s45 = int_to_ptr.vmem [resolvable:$true] %s44
      %50 = dma.hbm_to_vmem [thread:$0]  %s2, 128, %s45, [#allocation9], 64, 64, 4
    $region13: #{tpu_custom_call.1} parent=1 // pred_fallthru
      _
    // Predicated region
    $region14: #{tpu_custom_call.1} parent=1 // pred_check
      _
    $region15: #{tpu_custom_call.1} parent=1 // pred_check_branch
      %52 = sbr.rel (0) target = $region17
    $region16: #{tpu_custom_call.1} parent=1 // pred_region
      %s54 = ssub.s32 256, 256
      %55 = vsyncadd [#allocation9], %s54
      %s56 = sshll.u32 [#allocation10], 4
      %s57 = int_to_ptr.vmem [resolvable:$true] %s56
      %62 = dma.hbm_to_vmem [thread:$0]  %s3, 256, %s57, [#allocation9], 128, 128, 8
    $region17: #{tpu_custom_call.1} parent=1 // pred_fallthru
      _
    // Predicated region
    $region18: #{tpu_custom_call.1} parent=1 // pred_check
      _
    $region19: #{tpu_custom_call.1} parent=1 // pred_check_branch
      %64 = sbr.rel (0) target = $region21
    $region20: #{tpu_custom_call.1} parent=1 // pred_region
      _
    $region21: #{tpu_custom_call.1} parent=1 // pred_fallthru
      _
    // Predicated region
    $region22: #{tpu_custom_call.1} parent=1 // pred_check
      _
    $region23: #{tpu_custom_call.1} parent=1 // pred_check_branch
      %66 = sbr.rel (0) target = $region25
    $region24: #{tpu_custom_call.1} parent=1 // pred_region
      %s68 = ssub.s32 3200, 3200
      %69 = vsyncadd [#allocation12], %s68
      %s70 = sshll.u32 [#allocation11], 4
      %s71 = int_to_ptr.vmem [resolvable:$true] %s70
      %76 = dma.hbm_to_vmem [thread:$0]  %s5, 3200, %s71, [#allocation12], 64, 64, 4
    $region25: #{tpu_custom_call.1} parent=1 // pred_fallthru
      _
    // Predicated region
    $region26: #{tpu_custom_call.1} parent=1 // pred_check
      _
    $region27: #{tpu_custom_call.1} parent=1 // pred_check_branch
      %78 = sbr.rel (0) target = $region29
    $region28: #{tpu_custom_call.1} parent=1 // pred_region
      _
    $region29: #{tpu_custom_call.1} parent=1 // pred_fallthru
      _
    // Predicated region
    $region30: #{tpu_custom_call.1} parent=1 // pred_check
      _
    $region31: #{tpu_custom_call.1} parent=1 // pred_check_branch
      %80 = sbr.rel (0) target = $region33
    $region32: #{tpu_custom_call.1} parent=1 // pred_region
      %s82 = ssub.s32 1024, 1024
      %83 = vsyncadd [#allocation12], %s82
      %s84 = sshll.u32 [#allocation13], 4
      %s85 = int_to_ptr.vmem [resolvable:$true] %s84
      %90 = dma.hbm_to_vmem [thread:$0]  %s7, 1024, %s85, [#allocation12], 64, 64, 4
    $region33: #{tpu_custom_call.1} parent=1 // pred_fallthru
      _
    // Predicated region
    $region34: #{tpu_custom_call.1} parent=1 // pred_check
      _
    $region35: #{tpu_custom_call.1} parent=1 // pred_check_branch
      %92 = sbr.rel (0) target = $region37
    $region36: #{tpu_custom_call.1} parent=1 // pred_region
      _
    $region37: #{tpu_custom_call.1} parent=1 // pred_fallthru
      _
    // Predicated region
    $region38: #{tpu_custom_call.1} parent=1 // pred_check
      _
    $region39: #{tpu_custom_call.1} parent=1 // pred_check_branch
      %94 = sbr.rel (0) target = $region41
    $region40: #{tpu_custom_call.1} parent=1 // pred_region
      %95 = dma.done [#allocation6], 16
    $region41: #{tpu_custom_call.1} parent=1 // pred_fallthru
      _
    // Predicated region
    $region42: #{tpu_custom_call.1} parent=1 // pred_check
      _
    $region43: #{tpu_custom_call.1} parent=1 // pred_check_branch
      %97 = sbr.rel (0) target = $region45
    $region44: #{tpu_custom_call.1} parent=1 // pred_region
      %98 = dma.done [#allocation4], 128
    $region45: #{tpu_custom_call.1} parent=1 // pred_fallthru
      _
    // Predicated region
    $region46: #{tpu_custom_call.1} parent=1 // pred_check
      _
    $region47: #{tpu_custom_call.1} parent=1 // pred_check_branch
      %100 = sbr.rel (0) target = $region49
    $region48: #{tpu_custom_call.1} parent=1 // pred_region
      %101 = dma.done [#allocation9], 128
    $region49: #{tpu_custom_call.1} parent=1 // pred_fallthru
      _
    // Predicated region
    $region50: #{tpu_custom_call.1} parent=1 // pred_check
      _
    $region51: #{tpu_custom_call.1} parent=1 // pred_check_branch
      %103 = sbr.rel (0) target = $region53
    $region52: #{tpu_custom_call.1} parent=1 // pred_region
      %104 = dma.done [#allocation9], 256
    $region53: #{tpu_custom_call.1} parent=1 // pred_fallthru
      _
    // Predicated region
    $region54: #{tpu_custom_call.1} parent=1 // pred_check
      _
    $region55: #{tpu_custom_call.1} parent=1 // pred_check_branch
      %106 = sbr.rel (0) target = $region57
    $region56: #{tpu_custom_call.1} parent=1 // pred_region
      %107 = dma.done [#allocation12], 3200
    $region57: #{tpu_custom_call.1} parent=1 // pred_fallthru
      _
    // Predicated region
    $region58: #{tpu_custom_call.1} parent=1 // pred_check
      _
    $region59: #{tpu_custom_call.1} parent=1 // pred_check_branch
      %109 = sbr.rel (0) target = $region61
    $region60: #{tpu_custom_call.1} parent=1 // pred_region
      %110 = dma.done [#allocation12], 1024
    $region61: #{tpu_custom_call.1} parent=1 // pred_fallthru
      _
    %111 = sfence
    %v113 = vld [vmem:[#allocation7] sm:$0xf]
    %v114 = vld [vmem:[#allocation7 + $0x4] sm:$0xf]
    %v115 = vld [vmem:[#allocation10] sm:$0xff]
    %v116 = vld [vmem:[#allocation10 + $0x8] sm:$0xff]
    %v117 = vld [vmem:[%s4] sm:$0x3]
    %v119 = vlaneseq
    %v120 = vshrl.u32 %v119, 7
    %v121 = vsub.s32 0, %v120
    %v122 = vrot.slane %v117, %v121
    %v123 = vlaneseq
    %v124 = vshrl.u32 %v123, 7
    %v125 = vsub.s32 1, %v124
    %v126 = vrot.slane %v117, %v125
    %v131 = vunpack.c.l.b16 %v113
    %v132 = vunpack.c.l.b16 %v114
    %v133 = vpack.c.b16 %v132, %v131
    %v136 = vunpack.c.l.b16 %v115
    %v137 = vunpack.c.h.b16 %v115
    %v138 = vunpack.c.l.b16 %v116
    %v139 = vunpack.c.h.b16 %v116
    %v140 = vpack.c.b16 %v138, %v136
    %v141 = vpack.c.b16 %v139, %v137
    %vm144 = vcmask 130048
    %v146 = vsel %vm144, %v133, 0
    %148 = vmatprep.subr.bf16.mxu0 %v141
    %149 = vmatpush1.bf16.msra.mxu0 %v140
    %150 = vmatprep.subr.bf16.mxu0 0
    %151 = vmatpush1.bf16.msra.mxu0 0
    %152 = vmatprep.subr.bf16.mxu0 0
    %153 = vmatpush1.bf16.msra.mxu0 0
    %154 = vmatprep.subr.bf16.mxu0 0
    %155 = vmatpush1.bf16.msra.mxu0 0
    %156 = vmatprep.subr.bf16.mxu0 0
    %157 = vmatpush1.bf16.msra.mxu0 0
    %158 = vmatprep.subr.bf16.mxu0 0
    %159 = vmatpush1.bf16.msra.mxu0 0
    %160 = vmatprep.subr.bf16.mxu0 0
    %161 = vmatpush1.bf16.msra.mxu0 0
    %162 = vmatprep.subr.bf16.mxu0 0
    %163 = vmatpush1.bf16.msra.mxu0 0
    %164 = vmatprep.subr.bf16.mxu0 0
    %165 = vmatpush1.bf16.msra.mxu0 0
    %166 = vmatprep.subr.bf16.mxu0 0
    %167 = vmatpush1.bf16.msra.mxu0 0
    %168 = vmatprep.subr.bf16.mxu0 0
    %169 = vmatpush1.bf16.msra.mxu0 0
    %170 = vmatprep.subr.bf16.mxu0 0
    %171 = vmatpush1.bf16.msra.mxu0 0
    %172 = vmatprep.subr.bf16.mxu0 0
    %173 = vmatpush1.bf16.msra.mxu0 0
    %174 = vmatprep.subr.bf16.mxu0 0
    %175 = vmatpush1.bf16.msra.mxu0 0
    %176 = vmatprep.subr.bf16.mxu0 0
    %177 = vmatpush1.bf16.msra.mxu0 0
    %178 = vmatprep.subr.bf16.mxu0 0
    %179 = vmatpush1.bf16.msra.mxu0 0
    %180 = vmatprep.mubr.bf16.mxu0 0
    %181 = vmatmul.mubr.bf16.gmra.mrb[0].mxu0 %v146
    %v182 = vpop.f32.mrb[0].mxu0
    %v183 = vadd.f32 %v122, %v182
    %v184 = vpop.f32.mrb[0].mxu0
    %v185 = vadd.f32 %v126, %v184
    %v186 = vpop.f32.mrb[0].mxu0
    %v187 = vadd.f32 %v122, %v186
    %v188 = vpop.f32.mrb[0].mxu0
    %v189 = vadd.f32 %v126, %v188
    %190 = vdwg.mxu0
    %v191 = vmul.f32 %v185, 0.5
    %v192 = vmul.f32 %v189, 0.5
    %v193 = vmul.f32 %v185, 0.70710677
    %v194 = vmul.f32 %v189, 0.70710677
    %v195 = verf.f32.pop %v193
    %v196 = verf.f32.pop %v194
    %v197 = vadd.f32 %v195, 1.0
    %v198 = vadd.f32 %v196, 1.0
    %v199 = vmul.f32 %v191, %v197
    %v200 = vmul.f32 %v192, %v198
    %s201 = sld [smem:[#allocation3]]
    %s202 = sld [smem:[#allocation3 + $0x1]]
    %v203 = vand.u32 2147483647, %v183
    %vm204 = vcmp.le.f32.partialorder %v203, 0.7853982
    %vm205 = vcmp.lt.s32.totalorder %v183, 0
    %v206 = vand.u32 %v183, 2139095040
    %v207 = vshrl.u32 %v206, 23
    %v208 = vsub.s32 %v207, 127
    %v209 = vand.u32 2147483647, %v183
    %v210 = vand.u32 %v209, 8388607
    %v211 = vor.u32 %v210, 8388608
    %v212 = vsub.s32 0, %v211
    %v213 = vadd.s32 %v208, 1
    %vm214 = vcmp.gt.s32.totalorder %v213, 0
    %v215 = vsel %vm214, %v213, 0
    %v216 = vshrl.u32 %v215, 5
    %v217 = vand.u32 %v215, 31
    %v218 = vsub.s32 32, %v217
    %v219 = vshrl.u32 683565275, %v218
    %v220 = vshll.u32 683565275, %v217
    %v221 = vshrl.u32 2475754826, %v218
    %v222 = vor.u32 %v220, %v221
    %v223 = vshll.u32 2475754826, %v217
    %v224 = vshrl.u32 2131351028, %v218
    %v225 = vor.u32 %v223, %v224
    %v226 = vshll.u32 2131351028, %v217
    %v227 = vshrl.u32 2102212464, %v218
    %v228 = vor.u32 %v226, %v227
    %v229 = vshll.u32 2102212464, %v217
    %v230 = vshrl.u32 920167782, %v218
    %v231 = vor.u32 %v229, %v230
    %v232 = vshll.u32 920167782, %v217
    %v233 = vshrl.u32 1326507024, %v218
    %v234 = vor.u32 %v232, %v233
    %vm235 = vcmp.lt.s32.totalorder %v216, 1
    %vm236 = vcmp.lt.s32.totalorder %v216, 2
    %vm237 = vcmp.lt.s32.totalorder %v216, 3
    %vm238 = vcmp.lt.s32.totalorder %v216, 4
    %v239 = vsel %vm235, %v219, %v222
    %v240 = vsel %vm238, %v228, 2102212464
    %v241 = vsel %vm237, %v225, %v240
    %v242 = vsel %vm236, %v239, %v241
    %v243 = vsel %vm235, %v222, %v225
    %v244 = vsel %vm238, %v231, 920167782
    %v245 = vsel %vm237, %v228, %v244
    %v246 = vsel %vm236, %v243, %v245
    %v247 = vsel %vm235, %v225, %v228
    %v248 = vsel %vm238, %v234, 1326507024
    %v249 = vsel %vm237, %v231, %v248
    %v250 = vsel %vm236, %v247, %v249
    %v251 = vshll.u32 %v211, 8
    %v252 = vmul.u32.u64.compose %v251, %v250
    %v253 = vextract.low.u32 %v252
    %v254 = vextract.high.u32 %v252
    %v255 = vmul.u32.u64.compose %v251, %v246
    %v256 = vextract.low.u32 %v255
    %v257 = vextract.high.u32 %v255
    %v258 = vmul.u32 %v251, %v242
    %v259 = vadd.s32 %v254, %v256
    %vm260 = vc.u32 %v254, %v256
    %v261 = vadd.s32 %v257, 1
    %v262 = vsel %vm260, %v261, %v257
    %v263 = vadd.s32 %v258, %v262
    %v264 = vadd.s32 %v263, 536870912
    %v265 = vshrl.u32 %v264, 30
    %v266 = vshll.u32 %v265, 30
    %v267 = vsub.s32 %v263, %v266
    %vm268 = vcmp.lt.s32.totalorder %v267, 0
    %v269 = vsub.s32 0, %v267
    %v270 = vsel %vm268, %v269, %v267
    %v271 = vclz %v270
    %v272 = vsub.s32 %v271, 2
    %vm273 = vcmp.gt.s32.totalorder 0, %v272
    %v274 = vsel %vm273, 0, %v272
    %v275 = vsub.s32 32, %v274
    %v276 = vshll.u32 %v267, %v274
    %v277 = vshrl.u32 %v259, %v275
    %v278 = vor.u32 %v276, %v277
    %v279 = vsub.s32 4294967266, %v274
    %v280 = vadd.s32 %v279, 127
    %v281 = vshll.u32 %v280, 23
    %v282 = vor.u32 4788187, %v281
    %v283 = vand.u32 2147483647, %v282
    %v285 = vcvt.s32.f32 %v278
    %v286 = vmul.f32 %v285, %v283
    %v287 = vxor.u32 %v286, 2147483648
    %v288 = vsel %vm205, %v287, %v286
    %v289 = vsub.s32 4, %v265
    %v290 = vsel %vm205, %v289, %v265
    %v291 = vsel %vm204, %v183, %v288
    %v292 = vsel %vm204, 0, %v290
    %v293 = vcosq.f32.pop %v291
    %v294 = vsinq.f32.pop %v291
    %vm295 = vweird.f32 %v183
    %v296 = vand.u32 %v292, 3
    %vm297 = vcmp.lt.s32.totalorder %v296, 2
    %vm298 = vcmp.eq.s32.totalorder %v296, 0
    %v299 = vxor.u32 %v294, 2147483648
    %v300 = vsel %vm298, %v293, %v299
    %vm301 = vcmp.eq.s32.totalorder %v296, 2
    %v302 = vxor.u32 %v293, 2147483648
    %v303 = vsel %vm301, %v302, %v294
    %v304 = vsel %vm297, %v300, %v303
    %v305 = vsel %vm295, nan, %v304
    %v306 = vand.u32 2147483647, %v187
    %vm307 = vcmp.le.f32.partialorder %v306, 0.7853982
    %vm308 = vcmp.lt.s32.totalorder %v187, 0
    %v309 = vand.u32 %v187, 2139095040
    %v310 = vshrl.u32 %v309, 23
    %v311 = vsub.s32 %v310, 127
    %v312 = vand.u32 2147483647, %v187
    %v313 = vand.u32 %v312, 8388607
    %v314 = vor.u32 %v313, 8388608
    %v315 = vsub.s32 0, %v314
    %v316 = vadd.s32 %v311, 1
    %vm317 = vcmp.gt.s32.totalorder %v316, 0
    %v318 = vsel %vm317, %v316, 0
    %v319 = vshrl.u32 %v318, 5
    %v320 = vand.u32 %v318, 31
    %v321 = vsub.s32 32, %v320
    %v322 = vshrl.u32 683565275, %v321
    %v323 = vshll.u32 683565275, %v320
    %v324 = vshrl.u32 2475754826, %v321
    %v325 = vor.u32 %v323, %v324
    %v326 = vshll.u32 2475754826, %v320
    %v327 = vshrl.u32 2131351028, %v321
    %v328 = vor.u32 %v326, %v327
    %v329 = vshll.u32 2131351028, %v320
    %v330 = vshrl.u32 2102212464, %v321
    %v331 = vor.u32 %v329, %v330
    %v332 = vshll.u32 2102212464, %v320
    %v333 = vshrl.u32 920167782, %v321
    %v334 = vor.u32 %v332, %v333
    %v335 = vshll.u32 920167782, %v320
    %v336 = vshrl.u32 1326507024, %v321
    %v337 = vor.u32 %v335, %v336
    %vm338 = vcmp.lt.s32.totalorder %v319, 1
    %vm339 = vcmp.lt.s32.totalorder %v319, 2
    %vm340 = vcmp.lt.s32.totalorder %v319, 3
    %vm341 = vcmp.lt.s32.totalorder %v319, 4
    %v342 = vsel %vm338, %v322, %v325
    %v343 = vsel %vm341, %v331, 2102212464
    %v344 = vsel %vm340, %v328, %v343
    %v345 = vsel %vm339, %v342, %v344
    %v346 = vsel %vm338, %v325, %v328
    %v347 = vsel %vm341, %v334, 920167782
    %v348 = vsel %vm340, %v331, %v347
    %v349 = vsel %vm339, %v346, %v348
    %v350 = vsel %vm338, %v328, %v331
    %v351 = vsel %vm341, %v337, 1326507024
    %v352 = vsel %vm340, %v334, %v351
    %v353 = vsel %vm339, %v350, %v352
    %v354 = vshll.u32 %v314, 8
    %v355 = vmul.u32.u64.compose %v354, %v353
    %v356 = vextract.low.u32 %v355
    %v357 = vextract.high.u32 %v355
    %v358 = vmul.u32.u64.compose %v354, %v349
    %v359 = vextract.low.u32 %v358
    %v360 = vextract.high.u32 %v358
    %v361 = vmul.u32 %v354, %v345
    %v362 = vadd.s32 %v357, %v359
    %vm363 = vc.u32 %v357, %v359
    %v364 = vadd.s32 %v360, 1
    %v365 = vsel %vm363, %v364, %v360
    %v366 = vadd.s32 %v361, %v365
    %v367 = vadd.s32 %v366, 536870912
    %v368 = vshrl.u32 %v367, 30
    %v369 = vshll.u32 %v368, 30
    %v370 = vsub.s32 %v366, %v369
    %vm371 = vcmp.lt.s32.totalorder %v370, 0
    %v372 = vsub.s32 0, %v370
    %v373 = vsel %vm371, %v372, %v370
    %v374 = vclz %v373
    %v375 = vsub.s32 %v374, 2
    %vm376 = vcmp.gt.s32.totalorder 0, %v375
    %v377 = vsel %vm376, 0, %v375
    %v378 = vsub.s32 32, %v377
    %v379 = vshll.u32 %v370, %v377
    %v380 = vshrl.u32 %v362, %v378
    %v381 = vor.u32 %v379, %v380
    %v382 = vsub.s32 4294967266, %v377
    %v383 = vadd.s32 %v382, 127
    %v384 = vshll.u32 %v383, 23
    %v385 = vor.u32 4788187, %v384
    %v386 = vand.u32 2147483647, %v385
    %v388 = vcvt.s32.f32 %v381
    %v389 = vmul.f32 %v388, %v386
    %v390 = vxor.u32 %v389, 2147483648
    %v391 = vsel %vm308, %v390, %v389
    %v392 = vsub.s32 4, %v368
    %v393 = vsel %vm308, %v392, %v368
    %v394 = vsel %vm307, %v187, %v391
    %v395 = vsel %vm307, 0, %v393
    %v396 = vcosq.f32.pop %v394
    %v397 = vsinq.f32.pop %v394
    %vm398 = vweird.f32 %v187
    %v399 = vand.u32 %v395, 3
    %vm400 = vcmp.lt.s32.totalorder %v399, 2
    %vm401 = vcmp.eq.s32.totalorder %v399, 0
    %v402 = vxor.u32 %v397, 2147483648
    %v403 = vsel %vm401, %v396, %v402
    %vm404 = vcmp.eq.s32.totalorder %v399, 2
    %v405 = vxor.u32 %v396, 2147483648
    %v406 = vsel %vm404, %v405, %v397
    %v407 = vsel %vm400, %v403, %v406
    %v408 = vsel %vm398, nan, %v407
    %v409 = vstv %s201
    %v410 = vmul.f32 %v409, %v305
    %v411 = vmul.f32 %v409, %v408
    %v412 = vpack.c.bf16 %v411, %v410
    %413 = vst [vmem:[#allocation2] sm:$0xff] %v412
    %v414 = vand.u32 2147483647, %v183
    %vm415 = vcmp.le.f32.partialorder %v414, 0.7853982
    %vm416 = vcmp.lt.s32.totalorder %v183, 0
    %v417 = vand.u32 %v183, 2139095040
    %v418 = vshrl.u32 %v417, 23
    %v419 = vsub.s32 %v418, 127
    %v420 = vand.u32 2147483647, %v183
    %v421 = vand.u32 %v420, 8388607
    %v422 = vor.u32 %v421, 8388608
    %v423 = vsub.s32 0, %v422
    %v424 = vadd.s32 %v419, 1
    %vm425 = vcmp.gt.s32.totalorder %v424, 0
    %v426 = vsel %vm425, %v424, 0
    %v427 = vshrl.u32 %v426, 5
    %v428 = vand.u32 %v426, 31
    %v429 = vsub.s32 32, %v428
    %v430 = vshrl.u32 683565275, %v429
    %v431 = vshll.u32 683565275, %v428
    %v432 = vshrl.u32 2475754826, %v429
    %v433 = vor.u32 %v431, %v432
    %v434 = vshll.u32 2475754826, %v428
    %v435 = vshrl.u32 2131351028, %v429
    %v436 = vor.u32 %v434, %v435
    %v437 = vshll.u32 2131351028, %v428
    %v438 = vshrl.u32 2102212464, %v429
    %v439 = vor.u32 %v437, %v438
    %v440 = vshll.u32 2102212464, %v428
    %v441 = vshrl.u32 920167782, %v429
    %v442 = vor.u32 %v440, %v441
    %v443 = vshll.u32 920167782, %v428
    %v444 = vshrl.u32 1326507024, %v429
    %v445 = vor.u32 %v443, %v444
    %vm446 = vcmp.lt.s32.totalorder %v427, 1
    %vm447 = vcmp.lt.s32.totalorder %v427, 2
    %vm448 = vcmp.lt.s32.totalorder %v427, 3
    %vm449 = vcmp.lt.s32.totalorder %v427, 4
    %v450 = vsel %vm446, %v430, %v433
    %v451 = vsel %vm449, %v439, 2102212464
    %v452 = vsel %vm448, %v436, %v451
    %v453 = vsel %vm447, %v450, %v452
    %v454 = vsel %vm446, %v433, %v436
    %v455 = vsel %vm449, %v442, 920167782
    %v456 = vsel %vm448, %v439, %v455
    %v457 = vsel %vm447, %v454, %v456
    %v458 = vsel %vm446, %v436, %v439
    %v459 = vsel %vm449, %v445, 1326507024
    %v460 = vsel %vm448, %v442, %v459
    %v461 = vsel %vm447, %v458, %v460
    %v462 = vshll.u32 %v422, 8
    %v463 = vmul.u32.u64.compose %v462, %v461
    %v464 = vextract.low.u32 %v463
    %v465 = vextract.high.u32 %v463
    %v466 = vmul.u32.u64.compose %v462, %v457
    %v467 = vextract.low.u32 %v466
    %v468 = vextract.high.u32 %v466
    %v469 = vmul.u32 %v462, %v453
    %v470 = vadd.s32 %v465, %v467
    %vm471 = vc.u32 %v465, %v467
    %v472 = vadd.s32 %v468, 1
    %v473 = vsel %vm471, %v472, %v468
    %v474 = vadd.s32 %v469, %v473
    %v475 = vadd.s32 %v474, 536870912
    %v476 = vshrl.u32 %v475, 30
    %v477 = vshll.u32 %v476, 30
    %v478 = vsub.s32 %v474, %v477
    %vm479 = vcmp.lt.s32.totalorder %v478, 0
    %v480 = vsub.s32 0, %v478
    %v481 = vsel %vm479, %v480, %v478
    %v482 = vclz %v481
    %v483 = vsub.s32 %v482, 2
    %vm484 = vcmp.gt.s32.totalorder 0, %v483
    %v485 = vsel %vm484, 0, %v483
    %v486 = vsub.s32 32, %v485
    %v487 = vshll.u32 %v478, %v485
    %v488 = vshrl.u32 %v470, %v486
    %v489 = vor.u32 %v487, %v488
    %v490 = vsub.s32 4294967266, %v485
    %v491 = vadd.s32 %v490, 127
    %v492 = vshll.u32 %v491, 23
    %v493 = vor.u32 4788187, %v492
    %v494 = vand.u32 2147483647, %v493
    %v496 = vcvt.s32.f32 %v489
    %v497 = vmul.f32 %v496, %v494
    %v498 = vxor.u32 %v497, 2147483648
    %v499 = vsel %vm416, %v498, %v497
    %v500 = vsub.s32 4, %v476
    %v501 = vsel %vm416, %v500, %v476
    %v502 = vsel %vm415, %v183, %v499
    %v503 = vsel %vm415, 0, %v501
    %v504 = vcosq.f32.pop %v502
    %v505 = vsinq.f32.pop %v502
    %vm506 = vweird.f32 %v183
    %v507 = vadd.s32 %v503, 3
    %v508 = vand.u32 %v507, 3
    %vm509 = vcmp.lt.s32.totalorder %v508, 2
    %vm510 = vcmp.eq.s32.totalorder %v508, 0
    %v511 = vxor.u32 %v505, 2147483648
    %v512 = vsel %vm510, %v504, %v511
    %vm513 = vcmp.eq.s32.totalorder %v508, 2
    %v514 = vxor.u32 %v504, 2147483648
    %v515 = vsel %vm513, %v514, %v505
    %v516 = vsel %vm509, %v512, %v515
    %v517 = vsel %vm506, nan, %v516
    %v518 = vand.u32 2147483647, %v187
    %vm519 = vcmp.le.f32.partialorder %v518, 0.7853982
    %vm520 = vcmp.lt.s32.totalorder %v187, 0
    %v521 = vand.u32 %v187, 2139095040
    %v522 = vshrl.u32 %v521, 23
    %v523 = vsub.s32 %v522, 127
    %v524 = vand.u32 2147483647, %v187
    %v525 = vand.u32 %v524, 8388607
    %v526 = vor.u32 %v525, 8388608
    %v527 = vsub.s32 0, %v526
    %v528 = vadd.s32 %v523, 1
    %vm529 = vcmp.gt.s32.totalorder %v528, 0
    %v530 = vsel %vm529, %v528, 0
    %v531 = vshrl.u32 %v530, 5
    %v532 = vand.u32 %v530, 31
    %v533 = vsub.s32 32, %v532
    %v534 = vshrl.u32 683565275, %v533
    %v535 = vshll.u32 683565275, %v532
    %v536 = vshrl.u32 2475754826, %v533
    %v537 = vor.u32 %v535, %v536
    %v538 = vshll.u32 2475754826, %v532
    %v539 = vshrl.u32 2131351028, %v533
    %v540 = vor.u32 %v538, %v539
    %v541 = vshll.u32 2131351028, %v532
    %v542 = vshrl.u32 2102212464, %v533
    %v543 = vor.u32 %v541, %v542
    %v544 = vshll.u32 2102212464, %v532
    %v545 = vshrl.u32 920167782, %v533
    %v546 = vor.u32 %v544, %v545
    %v547 = vshll.u32 920167782, %v532
    %v548 = vshrl.u32 1326507024, %v533
    %v549 = vor.u32 %v547, %v548
    %vm550 = vcmp.lt.s32.totalorder %v531, 1
    %vm551 = vcmp.lt.s32.totalorder %v531, 2
    %vm552 = vcmp.lt.s32.totalorder %v531, 3
    %vm553 = vcmp.lt.s32.totalorder %v531, 4
    %v554 = vsel %vm550, %v534, %v537
    %v555 = vsel %vm553, %v543, 2102212464
    %v556 = vsel %vm552, %v540, %v555
    %v557 = vsel %vm551, %v554, %v556
    %v558 = vsel %vm550, %v537, %v540
    %v559 = vsel %vm553, %v546, 920167782
    %v560 = vsel %vm552, %v543, %v559
    %v561 = vsel %vm551, %v558, %v560
    %v562 = vsel %vm550, %v540, %v543
    %v563 = vsel %vm553, %v549, 1326507024
    %v564 = vsel %vm552, %v546, %v563
    %v565 = vsel %vm551, %v562, %v564
    %v566 = vshll.u32 %v526, 8
    %v567 = vmul.u32.u64.compose %v566, %v565
    %v568 = vextract.low.u32 %v567
    %v569 = vextract.high.u32 %v567
    %v570 = vmul.u32.u64.compose %v566, %v561
    %v571 = vextract.low.u32 %v570
    %v572 = vextract.high.u32 %v570
    %v573 = vmul.u32 %v566, %v557
    %v574 = vadd.s32 %v569, %v571
    %vm575 = vc.u32 %v569, %v571
    %v576 = vadd.s32 %v572, 1
    %v577 = vsel %vm575, %v576, %v572
    %v578 = vadd.s32 %v573, %v577
    %v579 = vadd.s32 %v578, 536870912
    %v580 = vshrl.u32 %v579, 30
    %v581 = vshll.u32 %v580, 30
    %v582 = vsub.s32 %v578, %v581
    %vm583 = vcmp.lt.s32.totalorder %v582, 0
    %v584 = vsub.s32 0, %v582
    %v585 = vsel %vm583, %v584, %v582
    %v586 = vclz %v585
    %v587 = vsub.s32 %v586, 2
    %vm588 = vcmp.gt.s32.totalorder 0, %v587
    %v589 = vsel %vm588, 0, %v587
    %v590 = vsub.s32 32, %v589
    %v591 = vshll.u32 %v582, %v589
    %v592 = vshrl.u32 %v574, %v590
    %v593 = vor.u32 %v591, %v592
    %v594 = vsub.s32 4294967266, %v589
    %v595 = vadd.s32 %v594, 127
    %v596 = vshll.u32 %v595, 23
    %v597 = vor.u32 4788187, %v596
    %v598 = vand.u32 2147483647, %v597
    %v600 = vcvt.s32.f32 %v593
    %v601 = vmul.f32 %v600, %v598
    %v602 = vxor.u32 %v601, 2147483648
    %v603 = vsel %vm520, %v602, %v601
    %v604 = vsub.s32 4, %v580
    %v605 = vsel %vm520, %v604, %v580
    %v606 = vsel %vm519, %v187, %v603
    %v607 = vsel %vm519, 0, %v605
    %v608 = vcosq.f32.pop %v606
    %v609 = vsinq.f32.pop %v606
    %vm610 = vweird.f32 %v187
    %v611 = vadd.s32 %v607, 3
    %v612 = vand.u32 %v611, 3
    %vm613 = vcmp.lt.s32.totalorder %v612, 2
    %vm614 = vcmp.eq.s32.totalorder %v612, 0
    %v615 = vxor.u32 %v609, 2147483648
    %v616 = vsel %vm614, %v608, %v615
    %vm617 = vcmp.eq.s32.totalorder %v612, 2
    %v618 = vxor.u32 %v608, 2147483648
    %v619 = vsel %vm617, %v618, %v609
    %v620 = vsel %vm613, %v616, %v619
    %v621 = vsel %vm610, nan, %v620
    %v622 = vmul.f32 %v409, %v517
    %v623 = vmul.f32 %v409, %v621
    %v624 = vpack.c.bf16 %v623, %v622
    %625 = vst [vmem:[#allocation2 + $0x8] sm:$0xff] %v624
    %v626 = vstv %s202
    %v627 = vmul.f32 %v626, %v199
    %v628 = vmul.f32 %v626, %v200
    %v629 = vpack.c.bf16 %v628, %v627
    %630 = vst [vmem:[#allocation2 + $0x10] sm:$0xff] %v629
    %v631 = vld [vmem:[#allocation8] sm:$0xf]
    %v632 = vld [vmem:[#allocation8 + $0x4] sm:$0xf]
    %v635 = vunpack.c.l.b16 %v631
    %v636 = vunpack.c.l.b16 %v632
    %v637 = vpack.c.b16 %v636, %v635
    %639 = vst.msk [vmem:[#allocation2 + $0x18] sm:$0xff] %vm144, %v637
    %v640 = vld [vmem:[#allocation2] sm:$0xff]
    %v641 = vld [vmem:[#allocation2 + $0x8] sm:$0xff]
    %v642 = vld [vmem:[#allocation2 + $0x10] sm:$0xff]
    %v643 = vld [vmem:[#allocation2 + $0x18] sm:$0xff]
    %v644 = vld [vmem:[#allocation11] sm:$0xf]
    %v645 = vld [vmem:[#allocation11 + $0x4] sm:$0xf]
    %v646 = vld [vmem:[#allocation11 + $0x8] sm:$0xf]
    %v647 = vld [vmem:[#allocation11 + $0xc] sm:$0xf]
    %v648 = vld [vmem:[#allocation11 + $0x10] sm:$0xf]
    %v649 = vld [vmem:[#allocation11 + $0x14] sm:$0xf]
    %v650 = vld [vmem:[#allocation11 + $0x18] sm:$0xf]
    %v651 = vld [vmem:[#allocation11 + $0x1c] sm:$0xf]
    %v652 = vld [vmem:[#allocation11 + $0x20] sm:$0xf]
    %v653 = vld [vmem:[#allocation11 + $0x24] sm:$0xf]
    %v654 = vld [vmem:[#allocation11 + $0x28] sm:$0xf]
    %v655 = vld [vmem:[#allocation11 + $0x2c] sm:$0xf]
    %v656 = vld [vmem:[#allocation11 + $0x30] sm:$0xf]
    %v657 = vld [vmem:[#allocation11 + $0x34] sm:$0xf]
    %v658 = vld [vmem:[#allocation11 + $0x38] sm:$0xf]
    %v659 = vld [vmem:[#allocation11 + $0x3c] sm:$0xf]
    %v660 = vld [vmem:[#allocation11 + $0x40] sm:$0xf]
    %v661 = vld [vmem:[#allocation11 + $0x44] sm:$0xf]
    %v662 = vld [vmem:[#allocation11 + $0x48] sm:$0xf]
    %v663 = vld [vmem:[#allocation11 + $0x4c] sm:$0xf]
    %v664 = vld [vmem:[#allocation11 + $0x50] sm:$0xf]
    %v665 = vld [vmem:[#allocation11 + $0x54] sm:$0xf]
    %v666 = vld [vmem:[#allocation11 + $0x58] sm:$0xf]
    %v667 = vld [vmem:[#allocation11 + $0x5c] sm:$0xf]
    %v668 = vld [vmem:[#allocation11 + $0x60] sm:$0xf]
    %v669 = vld [vmem:[#allocation11 + $0x64] sm:$0xf]
    %v670 = vld [vmem:[#allocation11 + $0x68] sm:$0xf]
    %v671 = vld [vmem:[#allocation11 + $0x6c] sm:$0xf]
    %v672 = vld [vmem:[#allocation11 + $0x70] sm:$0xf]
    %v673 = vld [vmem:[#allocation11 + $0x74] sm:$0xf]
    %v674 = vld [vmem:[#allocation11 + $0x78] sm:$0xf]
    %v675 = vld [vmem:[#allocation11 + $0x7c] sm:$0xf]
    %v676 = vld [vmem:[#allocation11 + $0x80] sm:$0xf]
    %v677 = vld [vmem:[#allocation11 + $0x84] sm:$0xf]
    %v678 = vld [vmem:[#allocation11 + $0x88] sm:$0xf]
    %v679 = vld [vmem:[#allocation11 + $0x8c] sm:$0xf]
    %v680 = vld [vmem:[#allocation11 + $0x90] sm:$0xf]
    %v681 = vld [vmem:[#allocation11 + $0x94] sm:$0xf]
    %v682 = vld [vmem:[#allocation11 + $0x98] sm:$0xf]
    %v683 = vld [vmem:[#allocation11 + $0x9c] sm:$0xf]
    %v684 = vld [vmem:[#allocation11 + $0xa0] sm:$0xf]
    %v685 = vld [vmem:[#allocation11 + $0xa4] sm:$0xf]
    %v686 = vld [vmem:[#allocation11 + $0xa8] sm:$0xf]
    %v687 = vld [vmem:[#allocation11 + $0xac] sm:$0xf]
    %v688 = vld [vmem:[#allocation11 + $0xb0] sm:$0xf]
    %v689 = vld [vmem:[#allocation11 + $0xb4] sm:$0xf]
    %v690 = vld [vmem:[#allocation11 + $0xb8] sm:$0xf]
    %v691 = vld [vmem:[#allocation11 + $0xbc] sm:$0xf]
    %v692 = vld [vmem:[#allocation11 + $0xc0] sm:$0xf]
    %v693 = vld [vmem:[#allocation11 + $0xc4] sm:$0xf]
    %v694 = vld [vmem:[%s6] sm:$0x1]
    %v696 = vlaneseq
    %v697 = vshrl.u32 %v696, 7
    %v698 = vsub.s32 0, %v697
    %v699 = vrot.slane %v694, %v698
    %v751 = vunpack.c.l.b16 %v644
    %v752 = vunpack.c.l.b16 %v645
    %v753 = vunpack.c.l.b16 %v646
    %v754 = vunpack.c.l.b16 %v647
    %v755 = vunpack.c.l.b16 %v648
    %v756 = vunpack.c.l.b16 %v649
    %v757 = vunpack.c.l.b16 %v650
    %v758 = vunpack.c.l.b16 %v651
    %v759 = vunpack.c.l.b16 %v652
    %v760 = vunpack.c.l.b16 %v653
    %v761 = vunpack.c.l.b16 %v654
    %v762 = vunpack.c.l.b16 %v655
    %v763 = vunpack.c.l.b16 %v656
    %v764 = vunpack.c.l.b16 %v657
    %v765 = vunpack.c.l.b16 %v658
    %v766 = vunpack.c.l.b16 %v659
    %v767 = vunpack.c.l.b16 %v660
    %v768 = vunpack.c.l.b16 %v661
    %v769 = vunpack.c.l.b16 %v662
    %v770 = vunpack.c.l.b16 %v663
    %v771 = vunpack.c.l.b16 %v664
    %v772 = vunpack.c.l.b16 %v665
    %v773 = vunpack.c.l.b16 %v666
    %v774 = vunpack.c.l.b16 %v667
    %v775 = vunpack.c.l.b16 %v668
    %v776 = vunpack.c.l.b16 %v669
    %v777 = vunpack.c.l.b16 %v670
    %v778 = vunpack.c.l.b16 %v671
    %v779 = vunpack.c.l.b16 %v672
    %v780 = vunpack.c.l.b16 %v673
    %v781 = vunpack.c.l.b16 %v674
    %v782 = vunpack.c.l.b16 %v675
    %v783 = vunpack.c.l.b16 %v676
    %v784 = vunpack.c.l.b16 %v677
    %v785 = vunpack.c.l.b16 %v678
    %v786 = vunpack.c.l.b16 %v679
    %v787 = vunpack.c.l.b16 %v680
    %v788 = vunpack.c.l.b16 %v681
    %v789 = vunpack.c.l.b16 %v682
    %v790 = vunpack.c.l.b16 %v683
    %v791 = vunpack.c.l.b16 %v684
    %v792 = vunpack.c.l.b16 %v685
    %v793 = vunpack.c.l.b16 %v686
    %v794 = vunpack.c.l.b16 %v687
    %v795 = vunpack.c.l.b16 %v688
    %v796 = vunpack.c.l.b16 %v689
    %v797 = vunpack.c.l.b16 %v690
    %v798 = vunpack.c.l.b16 %v691
    %v799 = vunpack.c.l.b16 %v692
    %v800 = vunpack.c.l.b16 %v693
    %v801 = vpack.c.b16 %v752, %v751
    %v802 = vpack.c.b16 %v754, %v753
    %v803 = vpack.c.b16 %v756, %v755
    %v804 = vpack.c.b16 %v758, %v757
    %v805 = vpack.c.b16 %v760, %v759
    %v806 = vpack.c.b16 %v762, %v761
    %v807 = vpack.c.b16 %v764, %v763
    %v808 = vpack.c.b16 %v766, %v765
    %v809 = vpack.c.b16 %v768, %v767
    %v810 = vpack.c.b16 %v770, %v769
    %v811 = vpack.c.b16 %v772, %v771
    %v812 = vpack.c.b16 %v774, %v773
    %v813 = vpack.c.b16 %v776, %v775
    %v814 = vpack.c.b16 %v778, %v777
    %v815 = vpack.c.b16 %v780, %v779
    %v816 = vpack.c.b16 %v782, %v781
    %v817 = vpack.c.b16 %v784, %v783
    %v818 = vpack.c.b16 %v786, %v785
    %v819 = vpack.c.b16 %v788, %v787
    %v820 = vpack.c.b16 %v790, %v789
    %v821 = vpack.c.b16 %v792, %v791
    %v822 = vpack.c.b16 %v794, %v793
    %v823 = vpack.c.b16 %v796, %v795
    %v824 = vpack.c.b16 %v798, %v797
    %v825 = vpack.c.b16 %v800, %v799
    %v852 = vsel %vm144, %v643, 0
    %854 = vmatprep.subr.bf16.mxu0 0
    %855 = vmatpush1.bf16.msra.mxu0 %v801
    %856 = vmatprep.subr.bf16.mxu0 0
    %857 = vmatpush1.bf16.msra.mxu0 %v802
    %858 = vmatprep.subr.bf16.mxu0 0
    %859 = vmatpush1.bf16.msra.mxu0 %v803
    %860 = vmatprep.subr.bf16.mxu0 0
    %861 = vmatpush1.bf16.msra.mxu0 %v804
    %862 = vmatprep.subr.bf16.mxu0 0
    %863 = vmatpush1.bf16.msra.mxu0 %v805
    %864 = vmatprep.subr.bf16.mxu0 0
    %865 = vmatpush1.bf16.msra.mxu0 %v806
    %866 = vmatprep.subr.bf16.mxu0 0
    %867 = vmatpush1.bf16.msra.mxu0 %v807
    %868 = vmatprep.subr.bf16.mxu0 0
    %869 = vmatpush1.bf16.msra.mxu0 %v808
    %870 = vmatprep.subr.bf16.mxu0 0
    %871 = vmatpush1.bf16.msra.mxu0 %v809
    %872 = vmatprep.subr.bf16.mxu0 0
    %873 = vmatpush1.bf16.msra.mxu0 %v810
    %874 = vmatprep.subr.bf16.mxu0 0
    %875 = vmatpush1.bf16.msra.mxu0 %v811
    %876 = vmatprep.subr.bf16.mxu0 0
    %877 = vmatpush1.bf16.msra.mxu0 %v812
    %878 = vmatprep.subr.bf16.mxu0 0
    %879 = vmatpush1.bf16.msra.mxu0 %v813
    %880 = vmatprep.subr.bf16.mxu0 0
    %881 = vmatpush1.bf16.msra.mxu0 %v814
    %882 = vmatprep.subr.bf16.mxu0 0
    %883 = vmatpush1.bf16.msra.mxu0 %v815
    %884 = vmatprep.subr.bf16.mxu0 0
    %885 = vmatpush1.bf16.msra.mxu0 %v816
    %886 = vmatprep.mubr.bf16.mxu0 %v641
    %887 = vmatmul.mubr.bf16.gmra.mrb[0].mxu0 %v640
    %v888 = vpop.f32.mrb[0].mxu0
    %v889 = vadd.f32 %v699, %v888
    %v890 = vpop.f32.mrb[0].mxu0
    %v891 = vpop.f32.mrb[0].mxu0
    %v892 = vadd.f32 %v699, %v891
    %v893 = vpop.f32.mrb[0].mxu0
    %894 = vdwg.mxu0
    %895 = vmatprep.subr.bf16.mxu0 0
    %896 = vmatpush1.bf16.msra.mxu0 %v817
    %897 = vmatprep.subr.bf16.mxu0 0
    %898 = vmatpush1.bf16.msra.mxu0 %v818
    %899 = vmatprep.subr.bf16.mxu0 0
    %900 = vmatpush1.bf16.msra.mxu0 %v819
    %901 = vmatprep.subr.bf16.mxu0 0
    %902 = vmatpush1.bf16.msra.mxu0 %v820
    %903 = vmatprep.subr.bf16.mxu0 0
    %904 = vmatpush1.bf16.msra.mxu0 %v821
    %905 = vmatprep.subr.bf16.mxu0 0
    %906 = vmatpush1.bf16.msra.mxu0 %v822
    %907 = vmatprep.subr.bf16.mxu0 0
    %908 = vmatpush1.bf16.msra.mxu0 %v823
    %909 = vmatprep.subr.bf16.mxu0 0
    %910 = vmatpush1.bf16.msra.mxu0 %v824
    %911 = vmatprep.subr.bf16.mxu0 0
    %912 = vmatpush1.bf16.msra.mxu0 %v825
    %913 = vmatprep.subr.bf16.mxu0 0
    %914 = vmatpush1.bf16.msra.mxu0 0
    %915 = vmatprep.subr.bf16.mxu0 0
    %916 = vmatpush1.bf16.msra.mxu0 0
    %917 = vmatprep.subr.bf16.mxu0 0
    %918 = vmatpush1.bf16.msra.mxu0 0
    %919 = vmatprep.subr.bf16.mxu0 0
    %920 = vmatpush1.bf16.msra.mxu0 0
    %921 = vmatprep.subr.bf16.mxu0 0
    %922 = vmatpush1.bf16.msra.mxu0 0
    %923 = vmatprep.subr.bf16.mxu0 0
    %924 = vmatpush1.bf16.msra.mxu0 0
    %925 = vmatprep.subr.bf16.mxu0 0
    %926 = vmatpush1.bf16.msra.mxu0 0
    %927 = vmatprep.mubr.bf16.mxu0 %v852
    %928 = vmatmul.mubr.bf16.gmra.mrb[0].mxu0 %v642
    %v929 = vpop.f32.mrb[0].mxu0
    %v930 = vadd.f32 %v889, %v929
    %v931 = vpop.f32.mrb[0].mxu0
    %v932 = vpop.f32.mrb[0].mxu0
    %v933 = vadd.f32 %v892, %v932
    %v934 = vpop.f32.mrb[0].mxu0
    %935 = vdwg.mxu0
    %v936 = vmax.f32 %v930, 0.0
    %v937 = vmax.f32 %v933, 0.0
    %v938 = vpack.c.bf16 %v937, %v936
    %v939 = vld [vmem:[#allocation13] sm:$0xf]
    %v940 = vld [vmem:[#allocation13 + $0x4] sm:$0xf]
    %v941 = vld [vmem:[#allocation13 + $0x8] sm:$0xf]
    %v942 = vld [vmem:[#allocation13 + $0xc] sm:$0xf]
    %v943 = vld [vmem:[#allocation13 + $0x10] sm:$0xf]
    %v944 = vld [vmem:[#allocation13 + $0x14] sm:$0xf]
    %v945 = vld [vmem:[#allocation13 + $0x18] sm:$0xf]
    %v946 = vld [vmem:[#allocation13 + $0x1c] sm:$0xf]
    %v947 = vld [vmem:[#allocation13 + $0x20] sm:$0xf]
    %v948 = vld [vmem:[#allocation13 + $0x24] sm:$0xf]
    %v949 = vld [vmem:[#allocation13 + $0x28] sm:$0xf]
    %v950 = vld [vmem:[#allocation13 + $0x2c] sm:$0xf]
    %v951 = vld [vmem:[#allocation13 + $0x30] sm:$0xf]
    %v952 = vld [vmem:[#allocation13 + $0x34] sm:$0xf]
    %v953 = vld [vmem:[#allocation13 + $0x38] sm:$0xf]
    %v954 = vld [vmem:[#allocation13 + $0x3c] sm:$0xf]
    %v955 = vld [vmem:[%s8] sm:$0x1]
    %v957 = vlaneseq
    %v958 = vshrl.u32 %v957, 7
    %v959 = vsub.s32 0, %v958
    %v960 = vrot.slane %v955, %v959
    %v978 = vunpack.c.l.b16 %v939
    %v979 = vunpack.c.l.b16 %v940
    %v980 = vunpack.c.l.b16 %v941
    %v981 = vunpack.c.l.b16 %v942
    %v982 = vunpack.c.l.b16 %v943
    %v983 = vunpack.c.l.b16 %v944
    %v984 = vunpack.c.l.b16 %v945
    %v985 = vunpack.c.l.b16 %v946
    %v986 = vunpack.c.l.b16 %v947
    %v987 = vunpack.c.l.b16 %v948
    %v988 = vunpack.c.l.b16 %v949
    %v989 = vunpack.c.l.b16 %v950
    %v990 = vunpack.c.l.b16 %v951
    %v991 = vunpack.c.l.b16 %v952
    %v992 = vunpack.c.l.b16 %v953
    %v993 = vunpack.c.l.b16 %v954
    %v994 = vpack.c.b16 %v979, %v978
    %v995 = vpack.c.b16 %v981, %v980
    %v996 = vpack.c.b16 %v983, %v982
    %v997 = vpack.c.b16 %v985, %v984
    %v998 = vpack.c.b16 %v987, %v986
    %v999 = vpack.c.b16 %v989, %v988
    %v1000 = vpack.c.b16 %v991, %v990
    %v1001 = vpack.c.b16 %v993, %v992
    %1010 = vmatprep.subr.bf16.mxu0 0
    %1011 = vmatpush1.bf16.msra.mxu0 %v994
    %1012 = vmatprep.subr.bf16.mxu0 0
    %1013 = vmatpush1.bf16.msra.mxu0 %v995
    %1014 = vmatprep.subr.bf16.mxu0 0
    %1015 = vmatpush1.bf16.msra.mxu0 %v996
    %1016 = vmatprep.subr.bf16.mxu0 0
    %1017 = vmatpush1.bf16.msra.mxu0 %v997
    %1018 = vmatprep.subr.bf16.mxu0 0
    %1019 = vmatpush1.bf16.msra.mxu0 %v998
    %1020 = vmatprep.subr.bf16.mxu0 0
    %1021 = vmatpush1.bf16.msra.mxu0 %v999
    %1022 = vmatprep.subr.bf16.mxu0 0
    %1023 = vmatpush1.bf16.msra.mxu0 %v1000
    %1024 = vmatprep.subr.bf16.mxu0 0
    %1025 = vmatpush1.bf16.msra.mxu0 %v1001
    %1026 = vmatprep.subr.bf16.mxu0 0
    %1027 = vmatpush1.bf16.msra.mxu0 0
    %1028 = vmatprep.subr.bf16.mxu0 0
    %1029 = vmatpush1.bf16.msra.mxu0 0
    %1030 = vmatprep.subr.bf16.mxu0 0
    %1031 = vmatpush1.bf16.msra.mxu0 0
    %1032 = vmatprep.subr.bf16.mxu0 0
    %1033 = vmatpush1.bf16.msra.mxu0 0
    %1034 = vmatprep.subr.bf16.mxu0 0
    %1035 = vmatpush1.bf16.msra.mxu0 0
    %1036 = vmatprep.subr.bf16.mxu0 0
    %1037 = vmatpush1.bf16.msra.mxu0 0
    %1038 = vmatprep.subr.bf16.mxu0 0
    %1039 = vmatpush1.bf16.msra.mxu0 0
    %1040 = vmatprep.subr.bf16.mxu0 0
    %1041 = vmatpush1.bf16.msra.mxu0 0
    %1042 = vmatprep.mubr.bf16.mxu0 0
    %1043 = vmatmul.mubr.bf16.gmra.mrb[0].mxu0 %v938
    %v1044 = vpop.f32.mrb[0].mxu0
    %v1045 = vadd.f32 %v960, %v1044
    %v1046 = vpop.f32.mrb[0].mxu0
    %v1047 = vpop.f32.mrb[0].mxu0
    %v1048 = vadd.f32 %v960, %v1047
    %v1049 = vpop.f32.mrb[0].mxu0
    %1050 = vdwg.mxu0
    %1051 = vst [vmem:[#allocation14] sm:$0xff] %v1045
    %1052 = vst [vmem:[#allocation14 + $0x8] sm:$0xff] %v1048
    // Predicated region
    $region62: #{tpu_custom_call.1} parent=1 // pred_check
      _
    $region63: #{tpu_custom_call.1} parent=1 // pred_check_branch
      %1054 = sbr.rel (0) target = $region65
    $region64: #{tpu_custom_call.1} parent=1 // pred_region
      %s1056 = ssub.s32 256, 256
      %1057 = vsyncadd [#allocation5], %s1056
      %s1058 = sshll.u32 [#allocation14], 4
      %s1059 = int_to_ptr.vmem [resolvable:$true] %s1058
      %1064 = dma.vmem_to_hbm [thread:$0]  %s1059, 256, %s9, [#allocation5], 128, 128, 8
    $region65: #{tpu_custom_call.1} parent=1 // pred_fallthru
      _
    // Predicated region
    $region66: #{tpu_custom_call.1} parent=1 // pred_check
      _
    $region67: #{tpu_custom_call.1} parent=1 // pred_check_branch
      %1066 = sbr.rel (0) target = $region69
    $region68: #{tpu_custom_call.1} parent=1 // pred_region
      %1067 = dma.done [#allocation5], 256
    $region69: #{tpu_custom_call.1} parent=1 // pred_fallthru
      _
    %1068 = vsyncpa [#allocation4], 1
    %1069 = vsyncpa [#allocation9], 1
    %1070 = vsyncpa [#allocation12], 1
    %1071 = vsyncpa [#allocation5], 1
    %1072 = vsyncpa [#allocation6], 1

</llo_original>
